<compile_context>
chip_gen: v5e
topology: v5e:2x2
jax: 0.10.0
libtpu: 0.0.40
codegen_flags: <defaults>
</compile_context>

<pallas_src>
import functools

import jax
import jax.numpy as jnp
from jax import lax
from jax.experimental import pallas as pl
from jax.experimental.pallas import tpu as pltpu

_LANE = 128
_SUBLANE = 8


def _sublane_unit(dtype) -> int:
    # f32 -> 8, bf16 -> 16, int8/fp8 -> 32 (sub-32-bit dtypes pack sublanes).
    return max(_SUBLANE, 32 // jnp.dtype(dtype).itemsize)


def _vmem_capacity_bytes() -> int:
    try:
        info = pltpu.get_tpu_info()
        cap = getattr(info, "vmem_capacity_bytes", None)
        if cap:
            return int(cap)
    except Exception:
        pass
    return 64 * 1024 * 1024  # conservative (v7x-sized) fallback


def _choose_fold(R: int, S: int) -> int:
    """Fold spatial columns into rows when R = N*C is small.

    Picks the largest k that divides S, keeps the folded column count
    lane-aligned (so folding never introduces masking) and wide (>= 2048),
    while growing the row count toward ~512.  Pure reshape -> no HBM copy;
    the per-row sums are recombined with a tiny reshape+sum in the wrapper.
    """
    if R >= 128 or S < 2 * 2048:
        return 1
    best = 1
    max_k = max(1, 512 // max(R, 1))
    for k in range(2, max_k + 1):
        cols = S // k
        if S % k == 0 and cols % _LANE == 0 and cols >= 2048:
            best = k
    return best


def _dice_partial_kernel(x_ref, y_ref, inter_ref, denom_ref,
                         inter_sc, denom_sc, *,
                         square: bool, chunk: int, num_chunks: int,
                         valid_last: int, need_mask: bool):
    """Accumulate per-row intersect / denominator over the spatial grid axis."""
    j = pl.program_id(1)
    nj = pl.num_programs(1)

    @pl.when(j == 0)
    def _init():
        inter_sc[...] = jnp.zeros_like(inter_sc)
        denom_sc[...] = jnp.zeros_like(denom_sc)

    tr, aw = inter_sc.shape

    # Register-carried accumulators for this grid step: the VMEM scratch is
    # read-modified-written only once per step, not once per 128-lane chunk.
    inter_acc = jnp.zeros((tr, aw), jnp.float32)
    denom_acc = jnp.zeros((tr, aw), jnp.float32)

    if need_mask:
        not_last = j != nj - 1
        lane_iota = lax.broadcasted_iota(jnp.int32, (tr, aw), 1)

    for c in range(num_chunks):
        sl = slice(c * chunk, (c + 1) * chunk)
        xc = x_ref[:, sl].astype(jnp.float32)
        yc = y_ref[:, sl].astype(jnp.float32)
        if need_mask:
            thr = valid_last - c * chunk        # static per chunk
            if thr < chunk:                     # chunk touches the ragged edge
                if thr <= 0:
                    keep = not_last
                else:
                    keep = jnp.logical_or(not_last, lane_iota < thr)
                # Mask BOTH operands so intersect AND denominator see zeros.
                xc = jnp.where(keep, xc, 0.0)
                yc = jnp.where(keep, yc, 0.0)
        inter_acc = inter_acc + xc * yc
        if square:
            denom_acc = denom_acc + (xc * xc + yc * yc)
        else:
            denom_acc = denom_acc + (xc + yc)

    inter_sc[...] += inter_acc
    denom_sc[...] += denom_acc

    # Epilogue: single cross-lane (XLU) reduce + narrow store per row block.
    @pl.when(j == nj - 1)
    def _finish():
        inter_ref[...] = jnp.sum(inter_sc[...], axis=1, keepdims=True)
        denom_ref[...] = jnp.sum(denom_sc[...], axis=1, keepdims=True)


def _dice_row_sums(xr, yr, *, square: bool):
    """Per-row (intersect, denominator) sums of shape (rows,). No pad copies."""
    rows, cols = int(xr.shape[0]), int(xr.shape[1])

    # Row tile: multiple of the sublane packing unit (or full extent when the
    # row count is tiny -- full-extent block dims are exempt from the /8 rule).
    sub = max(_sublane_unit(xr.dtype), _sublane_unit(yr.dtype))
    if rows < sub:
        tr = rows
    else:
        tr = min(64, (rows // sub) * sub)

    # VMEM-capacity-aware tile sizing (v5e/v6e: 128 MiB, v7x: 64 MiB).
    cap = _vmem_capacity_bytes()
    vmem_limit = max(16 << 20, min(cap - (16 << 20), 96 << 20))
    budget = max(8 << 20, vmem_limit // 2)

    pair_bytes = (jnp.dtype(xr.dtype).itemsize + jnp.dtype(yr.dtype).itemsize)
    if cols < _LANE:
        ts = cols                                  # full-extent (exempt) block
    else:
        by_budget = budget // (2 * tr * pair_bytes)  # 2 pipeline buffers
        max_ts = max(_LANE, min(8192, (by_budget // _LANE) * _LANE))
        ts = min(max_ts, (cols // _LANE) * _LANE)

    chunk = min(ts, _LANE)
    num_chunks = ts // chunk
    num_col_tiles = (cols + ts - 1) // ts
    valid_last = cols - (num_col_tiles - 1) * ts
    need_mask = (cols % ts) != 0
    num_row_tiles = (rows + tr - 1) // tr

    kernel = functools.partial(
        _dice_partial_kernel, square=square, chunk=chunk,
        num_chunks=num_chunks, valid_last=valid_last, need_mask=need_mask)

    inter, denom = pl.pallas_call(
        kernel,
        out_shape=(jax.ShapeDtypeStruct((rows, 1), jnp.float32),
                   jax.ShapeDtypeStruct((rows, 1), jnp.float32)),
        grid_spec=pltpu.PrefetchScalarGridSpec(
            num_scalar_prefetch=0,
            grid=(num_row_tiles, num_col_tiles),
            in_specs=[
                pl.BlockSpec((tr, ts), lambda i, j: (i, j)),
                pl.BlockSpec((tr, ts), lambda i, j: (i, j)),
            ],
            out_specs=(
                pl.BlockSpec((tr, 1), lambda i, j: (i, 0)),
                pl.BlockSpec((tr, 1), lambda i, j: (i, 0)),
            ),
            scratch_shapes=[
                pltpu.VMEM((tr, chunk), jnp.float32),  # intersect accumulator
                pltpu.VMEM((tr, chunk), jnp.float32),  # denominator accumulator
            ],
        ),
        compiler_params=pltpu.CompilerParams(
            dimension_semantics=("parallel", "arbitrary"),
            vmem_limit_bytes=int(vmem_limit),
        ),
    )(xr, yr)

    return inter[:, 0], denom[:, 0]


def soft_dice_loss(x, y_onehot, *, batch_dice=False, square=False, smooth=1.0):
    """Matches SoftDiceLoss.forward(x, y_onehot) from the PyTorch module."""
    assert x.shape == y_onehot.shape
    N, C = int(x.shape[0]), int(x.shape[1])
    R = N * C
    S = 1
    for d in x.shape[2:]:
        S *= int(d)

    # Keep the natural (N*C, spatial) layout (no transpose/copy); optionally
    # fold spatial into rows when R is small (free contiguous reshape).
    k = _choose_fold(R, S)
    rows, cols = R * k, S // k
    xr = jnp.reshape(x, (rows, cols))
    yr = jnp.reshape(y_onehot, (rows, cols))

    intersect, denominator = _dice_row_sums(xr, yr, square=square)

    if k > 1:  # recombine folded sub-rows (tiny already-reduced vectors)
        intersect = intersect.reshape(R, k).sum(axis=1)
        denominator = denominator.reshape(R, k).sum(axis=1)

    if batch_dice:
        intersect = intersect.reshape(N, C).sum(axis=0)
        denominator = denominator.reshape(N, C).sum(axis=0)

    dc = (2.0 * intersect + smooth) / (denominator + smooth)
    return 1.0 - jnp.mean(dc)


def _soft_dice_loss_ref(x, y_onehot, *, batch_dice=False, square=False,
                        smooth=1.0):
    """Pure-JAX reference mirroring the PyTorch forward exactly."""
    if batch_dice:
        axes = tuple([0] + list(range(2, x.ndim)))
    else:
        axes = tuple(range(2, x.ndim))
    intersect = (x * y_onehot).sum(axes)
    if square:
        denominator = (x ** 2 + y_onehot ** 2).sum(axes)
    else:
        denominator = (x + y_onehot).sum(axes)
    dc = (2.0 * intersect + smooth) / (denominator + smooth)
    return 1.0 - dc.mean()


if __name__ == "__main__":
    key = jax.random.PRNGKey(0)

    def make_inputs(k, N, C, H, W):
        kx, ky = jax.random.split(k)
        x = jax.nn.softmax(
            jax.random.normal(kx, (N, C, H, W), jnp.float32), axis=1)
        labels = jax.random.randint(ky, (N, H, W), 0, C)
        y = jnp.transpose(jax.nn.one_hot(labels, C, dtype=jnp.float32),
                          (0, 3, 1, 2))
        return x, y

    k0, k1, k2, k3 = jax.random.split(key, 4)

    def check(x, y, bd, sq):
        got = jax.block_until_ready(
            soft_dice_loss(x, y, batch_dice=bd, square=sq, smooth=1.0))
        want = _soft_dice_loss_ref(x, y, batch_dice=bd, square=sq, smooth=1.0)
        assert jnp.allclose(got, want, atol=1e-4, rtol=1e-4), (bd, sq, got, want)

    # Lane-aligned case (single full tile).
    x, y = make_inputs(k0, 2, 4, 16, 16)
    for bd in (False, True):
        for sq in (False, True):
            check(x, y, bd, sq)

    # Irregular shapes -> full-extent tiny blocks (no padding, no masking).
    x2, y2 = make_inputs(k1, 2, 3, 7, 9)
    check(x2, y2, False, False)
    check(x2, y2, True, True)

    # Irregular wide spatial -> multi-tile spatial grid with in-kernel masking.
    x3, y3 = make_inputs(k2, 2, 3, 17, 19)
    check(x3, y3, False, False)
    check(x3, y3, True, False)

    # Larger spatial -> exercises the spatial->row folding path.
    x4, y4 = make_inputs(k3, 2, 4, 64, 64)
    check(x4, y4, False, False)
    check(x4, y4, True, True)

    print("KERNEL_OK")
</pallas_src>

<mosaic_0001>
module attributes {stable_mosaic.version = 11 : i64} {
  func.func @_dice_partial_kernel(%arg0: i32, %arg1: i32, %arg2: memref<8x256xf32, #tpu.memory_space<vmem>>, %arg3: memref<8x256xf32, #tpu.memory_space<vmem>>, %arg4: memref<8x1xf32, #tpu.memory_space<vmem>>, %arg5: memref<8x1xf32, #tpu.memory_space<vmem>>, %arg6: memref<8x128xf32, #tpu.memory_space<vmem>>, %arg7: memref<8x128xf32, #tpu.memory_space<vmem>>) attributes {dimension_semantics = [#tpu.dimension_semantics<parallel>, #tpu.dimension_semantics<arbitrary>], iteration_bounds = array<i64: 1, 1>, scalar_prefetch = 0 : i64, scratch_operands = 2 : i64, tpu.core_type = #tpu.core_type<tc>, window_params = [{transform_indices = @transform_0, window_bounds = array<i64: 8, 256>}, {transform_indices = @transform_1, window_bounds = array<i64: 8, 256>}, {transform_indices = @transform_2, window_bounds = array<i64: 8, 1>}, {transform_indices = @transform_3, window_bounds = array<i64: 8, 1>}]} {
    %c0_i32 = arith.constant 0 : i32
    %0 = arith.cmpi eq, %arg1, %c0_i32 : i32
    %1 = arith.extui %0 : i1 to i32
    %c0_i32_0 = arith.constant 0 : i32
    %2 = arith.cmpi ne, %1, %c0_i32_0 : i32
    scf.if %2 {
      %cst_18 = arith.constant 0.000000e+00 : f32
      %26 = vector.broadcast %cst_18 : f32 to vector<8x128xf32>
      %c0_19 = arith.constant 0 : index
      %c0_20 = arith.constant 0 : index
      %27 = vector.load %arg6[%c0_19, %c0_20] : memref<8x128xf32, #tpu.memory_space<vmem>>, vector<8x128xf32>
      tpu.vector_store %arg6[%c0_19, %c0_20], %26 {strides = array<i32>} : memref<8x128xf32, #tpu.memory_space<vmem>>, vector<8x128xf32>,
      %cst_21 = arith.constant 0.000000e+00 : f32
      %28 = vector.broadcast %cst_21 : f32 to vector<8x128xf32>
      %c0_22 = arith.constant 0 : index
      %c0_23 = arith.constant 0 : index
      %29 = vector.load %arg7[%c0_22, %c0_23] : memref<8x128xf32, #tpu.memory_space<vmem>>, vector<8x128xf32>
      tpu.vector_store %arg7[%c0_22, %c0_23], %28 {strides = array<i32>} : memref<8x128xf32, #tpu.memory_space<vmem>>, vector<8x128xf32>,
    } else {
    }
    %cst = arith.constant 0.000000e+00 : f32
    %3 = vector.broadcast %cst : f32 to vector<8x128xf32>
    %cst_1 = arith.constant 0.000000e+00 : f32
    %4 = vector.broadcast %cst_1 : f32 to vector<8x128xf32>
    %c0 = arith.constant 0 : index
    %c0_2 = arith.constant 0 : index
    %5 = vector.load %arg2[%c0, %c0_2] : memref<8x256xf32, #tpu.memory_space<vmem>>, vector<8x128xf32>
    %c0_3 = arith.constant 0 : index
    %c0_4 = arith.constant 0 : index
    %6 = vector.load %arg3[%c0_3, %c0_4] : memref<8x256xf32, #tpu.memory_space<vmem>>, vector<8x128xf32>
    %7 = arith.mulf %5, %6 : vector<8x128xf32>
    %8 = arith.addf %3, %7 : vector<8x128xf32>
    %9 = arith.addf %5, %6 : vector<8x128xf32>
    %10 = arith.addf %4, %9 : vector<8x128xf32>
    %c0_5 = arith.constant 0 : index
    %c128 = arith.constant 128 : index
    %11 = vector.load %arg2[%c0_5, %c128] : memref<8x256xf32, #tpu.memory_space<vmem>>, vector<8x128xf32>
    %c0_6 = arith.constant 0 : index
    %c128_7 = arith.constant 128 : index
    %12 = vector.load %arg3[%c0_6, %c128_7] : memref<8x256xf32, #tpu.memory_space<vmem>>, vector<8x128xf32>
    %13 = arith.mulf %11, %12 : vector<8x128xf32>
    %14 = arith.addf %8, %13 : vector<8x128xf32>
    %15 = arith.addf %11, %12 : vector<8x128xf32>
    %16 = arith.addf %10, %15 : vector<8x128xf32>
    %c0_8 = arith.constant 0 : index
    %c0_9 = arith.constant 0 : index
    %17 = vector.load %arg6[%c0_8, %c0_9] : memref<8x128xf32, #tpu.memory_space<vmem>>, vector<8x128xf32>
    %18 = arith.addf %17, %14 : vector<8x128xf32>
    %c0_10 = arith.constant 0 : index
    %c0_11 = arith.constant 0 : index
    %19 = vector.load %arg6[%c0_10, %c0_11] : memref<8x128xf32, #tpu.memory_space<vmem>>, vector<8x128xf32>
    tpu.vector_store %arg6[%c0_10, %c0_11], %18 {strides = array<i32>} : memref<8x128xf32, #tpu.memory_space<vmem>>, vector<8x128xf32>,
    %c0_12 = arith.constant 0 : index
    %c0_13 = arith.constant 0 : index
    %20 = vector.load %arg7[%c0_12, %c0_13] : memref<8x128xf32, #tpu.memory_space<vmem>>, vector<8x128xf32>
    %21 = arith.addf %20, %16 : vector<8x128xf32>
    %c0_14 = arith.constant 0 : index
    %c0_15 = arith.constant 0 : index
    %22 = vector.load %arg7[%c0_14, %c0_15] : memref<8x128xf32, #tpu.memory_space<vmem>>, vector<8x128xf32>
    tpu.vector_store %arg7[%c0_14, %c0_15], %21 {strides = array<i32>} : memref<8x128xf32, #tpu.memory_space<vmem>>, vector<8x128xf32>,
    %c0_i32_16 = arith.constant 0 : i32
    %23 = arith.cmpi eq, %arg1, %c0_i32_16 : i32
    %24 = arith.extui %23 : i1 to i32
    %c0_i32_17 = arith.constant 0 : i32
    %25 = arith.cmpi ne, %24, %c0_i32_17 : i32
    scf.if %25 {
      %c0_18 = arith.constant 0 : index
      %c0_19 = arith.constant 0 : index
      %26 = vector.load %arg6[%c0_18, %c0_19] : memref<8x128xf32, #tpu.memory_space<vmem>>, vector<8x128xf32>
      %cst_20 = arith.constant dense<0.000000e+00> : vector<8xf32>
      %27 = vector.multi_reduction <add>, %26, %cst_20 [1] : vector<8x128xf32> to vector<8xf32>
      %28 = vector.shape_cast %27 : vector<8xf32> to vector<8x1xf32>
      %c0_21 = arith.constant 0 : index
      %c0_22 = arith.constant 0 : index
      %29 = vector.load %arg4[%c0_21, %c0_22] : memref<8x1xf32, #tpu.memory_space<vmem>>, vector<8x1xf32>
      tpu.vector_store %arg4[%c0_21, %c0_22], %28 {strides = array<i32>} : memref<8x1xf32, #tpu.memory_space<vmem>>, vector<8x1xf32>,
      %c0_23 = arith.constant 0 : index
      %c0_24 = arith.constant 0 : index
      %30 = vector.load %arg7[%c0_23, %c0_24] : memref<8x128xf32, #tpu.memory_space<vmem>>, vector<8x128xf32>
      %cst_25 = arith.constant dense<0.000000e+00> : vector<8xf32>
      %31 = vector.multi_reduction <add>, %30, %cst_25 [1] : vector<8x128xf32> to vector<8xf32>
      %32 = vector.shape_cast %31 : vector<8xf32> to vector<8x1xf32>
      %c0_26 = arith.constant 0 : index
      %c0_27 = arith.constant 0 : index
      %33 = vector.load %arg5[%c0_26, %c0_27] : memref<8x1xf32, #tpu.memory_space<vmem>>, vector<8x1xf32>
      tpu.vector_store %arg5[%c0_26, %c0_27], %32 {strides = array<i32>} : memref<8x1xf32, #tpu.memory_space<vmem>>, vector<8x1xf32>,
    } else {
    }
    return
  }
  func.func @transform_0(%arg0: i32, %arg1: i32) -> (i32, i32) {
    %c0_i32 = arith.constant 0 : i32
    return %arg0, %arg1 : i32, i32
  }
  func.func @transform_1(%arg0: i32, %arg1: i32) -> (i32, i32) {
    %c0_i32 = arith.constant 0 : i32
    return %arg0, %arg1 : i32, i32
  }
  func.func @transform_2(%arg0: i32, %arg1: i32) -> (i32, i32) {
    %c0_i32 = arith.constant 0 : i32
    %c0_i32_0 = arith.constant 0 : i32
    return %arg0, %c0_i32 : i32, i32
  }
  func.func @transform_3(%arg0: i32, %arg1: i32) -> (i32, i32) {
    %c0_i32 = arith.constant 0 : i32
    %c0_i32_0 = arith.constant 0 : i32
    return %arg0, %c0_i32 : i32, i32
  }
}

</mosaic_0001>

<llo_original>
// kernel: tpu_custom_call.1
$region0: #{tpu_custom_call.1}
  #allocation0 [shape = 'u32[]', space=smem, size = 0x4, offset = 0x4, fixed_abs, tag = 'smem constant byte address 0x4 - core index']
  #allocation1 [shape = 'u32[72,128]{1,0:T(1,128)}', space=vmem, size = 0x9000, scoped, tag = 'internal scratch']
  #allocation2 [shape = 'f32[8,128]{1,0:T(8,128)}', space=vmem, size = 0x1000, scoped, tag = 'scratch operand']
  #allocation3 [shape = 'f32[8,128]{1,0:T(8,128)}', space=vmem, size = 0x1000, scoped, tag = 'scratch operand']
  %s0 = inlined_call_operand.hbm [shape: f32[8,256], index: 0, kind: input, shape index: {}]
  %s1 = inlined_call_operand.hbm [shape: f32[8,256], index: 1, kind: input, shape index: {}]
  %s2 = inlined_call_operand.vmem [shape: f32[8,1], index: 2, kind: output, shape index: {0}]
  %s3 = inlined_call_operand.vmem [shape: f32[8,1], index: 3, kind: output, shape index: {1}]
  %4 = xla_tuple %s2, %s3
  %s5 = sld [smem:[#allocation0]]
  $region42: #{tpu_custom_call.1} parent=0
    _
  %s7 = ssub.s32 1, %s5
  %s8 = scalar_select 0, %s7, %s5
  $region1: #{tpu_custom_call.1} parent=0
    #allocation4 [shape = 'u8[8192]{0}', space=vmem, size = 0x2000, scoped, tag = 'input window, operand 0, single buffered']
    #allocation5 [shape = 's32[1]{0}', space=sflag, size = 0x4, scoped, tag = 'scoped memory for tpu_custom_call.1']
    #allocation6 [shape = 'u8[8192]{0}', space=vmem, size = 0x2000, scoped, tag = 'input window, operand 1, single buffered']
    #allocation7 [shape = 's32[1]{0}', space=sflag, size = 0x4, scoped, tag = 'scoped memory for tpu_custom_call.1']
    %9 = vsyncpa [#allocation5], 0
    %10 = vsyncpa [#allocation7], 0
    // Predicated region
    $region2: #{tpu_custom_call.1} parent=1 // pred_check
      _
    $region3: #{tpu_custom_call.1} parent=1 // pred_check_branch
      %12 = sbr.rel (0) target = $region5
    $region4: #{tpu_custom_call.1} parent=1 // pred_region
      %14 = vsyncadd [#allocation5], 0
      %s16 = sshll.u32 %s0, 4
      %s17 = int_to_ptr.hbm [resolvable:$true] %s16
      %s18 = sshll.u32 [#allocation4], 4
      %s19 = int_to_ptr.vmem [resolvable:$true] %s18
      %21 = dma.hbm_to_vmem [thread:$0]  %s17, 256, %s19, [#allocation5]
    $region5: #{tpu_custom_call.1} parent=1 // pred_fallthru
      _
    // Predicated region
    $region6: #{tpu_custom_call.1} parent=1 // pred_check
      _
    $region7: #{tpu_custom_call.1} parent=1 // pred_check_branch
      %23 = sbr.rel (0) target = $region9
    $region8: #{tpu_custom_call.1} parent=1 // pred_region
      %25 = vsyncadd [#allocation7], 0
      %s27 = sshll.u32 %s1, 4
      %s28 = int_to_ptr.hbm [resolvable:$true] %s27
      %s29 = sshll.u32 [#allocation6], 4
      %s30 = int_to_ptr.vmem [resolvable:$true] %s29
      %32 = dma.hbm_to_vmem [thread:$0]  %s28, 256, %s30, [#allocation7]
    $region9: #{tpu_custom_call.1} parent=1 // pred_fallthru
      _
    // Predicated region
    $region10: #{tpu_custom_call.1} parent=1 // pred_check
      _
    $region11: #{tpu_custom_call.1} parent=1 // pred_check_branch
      %34 = sbr.rel (0) target = $region13
    $region12: #{tpu_custom_call.1} parent=1 // pred_region
      %36 = dma.done [#allocation5], 256
    $region13: #{tpu_custom_call.1} parent=1 // pred_fallthru
      _
    // Predicated region
    $region14: #{tpu_custom_call.1} parent=1 // pred_check
      _
    $region15: #{tpu_custom_call.1} parent=1 // pred_check_branch
      %38 = sbr.rel (0) target = $region17
    $region16: #{tpu_custom_call.1} parent=1 // pred_region
      %40 = dma.done [#allocation7], 256
    $region17: #{tpu_custom_call.1} parent=1 // pred_fallthru
      _
    %p41 = scmp.eq.s32.totalorder 0, 0
    // Predicated region
    $region18: #{tpu_custom_call.1} parent=1 // pred_check
      %p42 = pneg %p41
    $region19: #{tpu_custom_call.1} parent=1 // pred_check_branch
      %44 = sbr.rel (%p42) target = $region21
    $region20: #{tpu_custom_call.1} parent=1 // pred_region
      %45 = vst [vmem:[#allocation2] sm:$0xff] 0.0
      %46 = vst [vmem:[#allocation3] sm:$0xff] 0.0
    $region21: #{tpu_custom_call.1} parent=1 // pred_fallthru
      _
    %v47 = vld [vmem:[#allocation4] sm:$0xff]
    %v48 = vld [vmem:[#allocation6] sm:$0xff]
    %v49 = vmul.f32 %v47, %v48
    %v50 = vadd.f32 %v49, 0.0
    %v51 = vadd.f32 %v47, %v48
    %v52 = vadd.f32 %v51, 0.0
    %v53 = vld [vmem:[#allocation4 + $0x8] sm:$0xff]
    %v54 = vld [vmem:[#allocation6 + $0x8] sm:$0xff]
    %v55 = vmul.f32 %v53, %v54
    %v56 = vadd.f32 %v50, %v55
    %v57 = vadd.f32 %v53, %v54
    %v58 = vadd.f32 %v52, %v57
    %v59 = vld [vmem:[#allocation2] sm:$0xff]
    %v60 = vadd.f32 %v59, %v56
    %61 = vst [vmem:[#allocation2] sm:$0xff] %v60
    %v62 = vld [vmem:[#allocation3] sm:$0xff]
    %v63 = vadd.f32 %v62, %v58
    %64 = vst [vmem:[#allocation3] sm:$0xff] %v63
    // Predicated region
    $region22: #{tpu_custom_call.1} parent=1 // pred_check
      %p65 = pneg %p41
    $region23: #{tpu_custom_call.1} parent=1 // pred_check_branch
      %67 = sbr.rel (%p65) target = $region25
    $region24: #{tpu_custom_call.1} parent=1 // pred_region
      %v68 = vld [vmem:[#allocation2] sm:$0xff]
      %69 = vadd.xlane.f32.xlu0 %v68
      %v70 = vpop.xlane.xlu0 %69
      %vm71 = vcmask 7168
      %72 = vst.msk [vmem:[%s2] sm:$0xff] %vm71, %v70
      %v73 = vld [vmem:[#allocation3] sm:$0xff]
      %74 = vadd.xlane.f32.xlu0 %v73
      %v75 = vpop.xlane.xlu0 %74
      %76 = vst.msk [vmem:[%s3] sm:$0xff] %vm71, %v75
    $region25: #{tpu_custom_call.1} parent=1 // pred_fallthru
      _
    // Predicated region
    $region26: #{tpu_custom_call.1} parent=1 // pred_check
      _
    $region27: #{tpu_custom_call.1} parent=1 // pred_check_branch
      %78 = sbr.rel (0) target = $region29
    $region28: #{tpu_custom_call.1} parent=1 // pred_region
      _
    $region29: #{tpu_custom_call.1} parent=1 // pred_fallthru
      _
    // Predicated region
    $region30: #{tpu_custom_call.1} parent=1 // pred_check
      _
    $region31: #{tpu_custom_call.1} parent=1 // pred_check_branch
      %80 = sbr.rel (0) target = $region33
    $region32: #{tpu_custom_call.1} parent=1 // pred_region
      _
    $region33: #{tpu_custom_call.1} parent=1 // pred_fallthru
      _
    // Predicated region
    $region34: #{tpu_custom_call.1} parent=1 // pred_check
      _
    $region35: #{tpu_custom_call.1} parent=1 // pred_check_branch
      %82 = sbr.rel (0) target = $region37
    $region36: #{tpu_custom_call.1} parent=1 // pred_region
      _
    $region37: #{tpu_custom_call.1} parent=1 // pred_fallthru
      _
    // Predicated region
    $region38: #{tpu_custom_call.1} parent=1 // pred_check
      _
    $region39: #{tpu_custom_call.1} parent=1 // pred_check_branch
      %84 = sbr.rel (0) target = $region41
    $region40: #{tpu_custom_call.1} parent=1 // pred_region
      _
    $region41: #{tpu_custom_call.1} parent=1 // pred_fallthru
      _
    %85 = vsyncpa [#allocation5], 1
    %86 = vsyncpa [#allocation7], 1

</llo_original>
